<compile_context>
chip_gen: v7x
topology: tpu7x:2x2x1
jax: 0.10.0
libtpu: 0.0.40
codegen_flags: <defaults>
</compile_context>

<pallas_src>
import jax
import jax.numpy as jnp
from jax.experimental import pallas as pl
from jax.experimental.pallas import tpu as pltpu

# ---- problem sizes (small, consistent with the module) -----------------------
N = 2          # batch
C_IN = 4       # in_channels
C_OUT = 8      # out_channels
K = 3          # kernel_size
DIL = 2        # dilation (fixed in the module)
L = 32         # input sequence length

POOL = 3                                   # MaxPool1d(kernel_size=3), stride=3
L_CONV = L - DIL * (K - 1)                 # conv output length            = 28
L_POOL = (L_CONV - POOL) // POOL + 1       # pooled output length (floor)  = 9


def block_kernel(x_ref, w_ref, o_ref):
    # x_ref: (N, C_IN, L)        -- PyTorch NCL layout, L on the lane axis
    # w_ref: (C_OUT, K*C_IN)     -- repacked conv weight (k-major columns), done at init
    # o_ref: (N, C_OUT, L_POOL)  -- PyTorch output layout
    x = x_ref[...]
    w2d = w_ref[...]

    # K dilated taps, sliced once from the whole batch (3 lane shifts total, shared by
    # both batch elements).  Each tap: (N, C_IN, L_CONV).
    taps = [x[:, :, DIL * k: DIL * k + L_CONV] for k in range(K)]

    # One-hot "pick column 3*p + r" selection matrices for MaxPool1d(3, stride=3),
    # built on the VPU from 2D iotas.  Pooling then runs on the otherwise-idle MXU.
    row = jax.lax.broadcasted_iota(jnp.int32, (L_CONV, L_POOL), 0)
    col = jax.lax.broadcasted_iota(jnp.int32, (L_CONV, L_POOL), 1)
    sels = [(row == POOL * col + r).astype(jnp.float32) for r in range(POOL)]

    pooled = []
    for n in range(N):  # N, K static & tiny -> fully unrolled; extra MXU pushes are free
        # im2col RHS for batch n: sublane-axis concat only (no lane relayout),
        # rows ordered k-major to match w2d columns.  Shape (K*C_IN, L_CONV) = (12, 28).
        rhs = jnp.concatenate([t[n] for t in taps], axis=0)

        # Fused dilated Conv1d for batch n: (C_OUT, K*C_IN) @ (K*C_IN, L_CONV).
        y = jnp.dot(w2d, rhs, preferred_element_type=jnp.float32)       # (C_OUT, L_CONV)

        # MaxPool1d(3), floor mode: out[:, p] = max_r y[:, 3p + r] (columns 0..26 used).
        cand = [jnp.dot(y, s, preferred_element_type=jnp.float32) for s in sels]
        pooled.append(jnp.maximum(jnp.maximum(cand[0], cand[1]), cand[2]))

    # Single full-ref store (one epilogue, not one masked store per batch).
    o_ref[...] = jnp.stack(pooled, axis=0).astype(o_ref.dtype)


@jax.jit
def block_forward(x_ncl, w2d):
    """x_ncl: (N, C_IN, L) float32 (PyTorch layout); w2d: (C_OUT, K*C_IN) repacked weight."""
    # Gridless call: full-array BlockSpecs pinned to VMEM, single kernel invocation.
    return pl.pallas_call(
        block_kernel,
        out_shape=jax.ShapeDtypeStruct((N, C_OUT, L_POOL), x_ncl.dtype),
        in_specs=[
            pl.BlockSpec(memory_space=pltpu.MemorySpace.VMEM),
            pl.BlockSpec(memory_space=pltpu.MemorySpace.VMEM),
        ],
        out_specs=pl.BlockSpec(memory_space=pltpu.MemorySpace.VMEM),
    )(x_ncl, w2d)


def repack_weight(w_oik):
    """Module-init-time repack: w2d[o, k*C_IN + c] = w[o, c, k] (96 elements, done once)."""
    return jnp.swapaxes(w_oik, 1, 2).reshape(C_OUT, K * C_IN)


def reference_forward(x_ncl, w_oik):
    """Pure-JAX reference: Conv1d(dilation=2, bias=False) + MaxPool1d(3)."""
    conv = sum(
        jnp.einsum("nct,oc->not",
                   x_ncl[:, :, DIL * k: DIL * k + L_CONV], w_oik[:, :, k],
                   precision=jax.lax.Precision.HIGHEST)
        for k in range(K))
    conv = conv[:, :, : L_POOL * POOL]
    return conv.reshape(N, C_OUT, L_POOL, POOL).max(axis=-1)


if __name__ == "__main__":
    key = jax.random.PRNGKey(0)
    kx, kw = jax.random.split(key)
    x = jax.random.normal(kx, (N, C_IN, L), dtype=jnp.float32)
    # deterministic synthetic Conv1d weight, PyTorch shape (C_OUT, C_IN, K)
    w = jax.random.normal(kw, (C_OUT, C_IN, K), dtype=jnp.float32) * 0.1

    # hoisted to "module init": repack once, reuse every forward call
    w2d = repack_weight(w)

    out = jax.block_until_ready(block_forward(x, w2d))

    ref = reference_forward(x, w)
    assert out.shape == (N, C_OUT, L_POOL), out.shape
    assert jnp.allclose(out, ref, atol=2e-2, rtol=2e-2), \
        float(jnp.max(jnp.abs(out - ref)))

    print("KERNEL_OK")
</pallas_src>

<mosaic_0001>
module attributes {stable_mosaic.version = 11 : i64} {
  func.func @block_kernel(%arg0: memref<2x4x32xf32, #tpu.memory_space<vmem>>, %arg1: memref<8x12xf32, #tpu.memory_space<vmem>>, %arg2: memref<2x8x9xf32, #tpu.memory_space<vmem>>) attributes {dimension_semantics = [], scalar_prefetch = 0 : i64, scratch_operands = 0 : i64, tpu.core_type = #tpu.core_type<tc>} {
    %c0 = arith.constant 0 : index
    %c0_0 = arith.constant 0 : index
    %c0_1 = arith.constant 0 : index
    %0 = vector.load %arg0[%c0, %c0_0, %c0_1] : memref<2x4x32xf32, #tpu.memory_space<vmem>>, vector<2x4x32xf32>
    %c0_2 = arith.constant 0 : index
    %c0_3 = arith.constant 0 : index
    %1 = vector.load %arg1[%c0_2, %c0_3] : memref<8x12xf32, #tpu.memory_space<vmem>>, vector<8x12xf32>
    %2 = vector.extract_strided_slice %0 {offsets = [0, 0, 0], sizes = [2, 4, 28], strides = [1, 1, 1]} : vector<2x4x32xf32> to vector<2x4x28xf32>
    %3 = vector.extract_strided_slice %0 {offsets = [0, 0, 2], sizes = [2, 4, 28], strides = [1, 1, 1]} : vector<2x4x32xf32> to vector<2x4x28xf32>
    %4 = vector.extract_strided_slice %0 {offsets = [0, 0, 4], sizes = [2, 4, 28], strides = [1, 1, 1]} : vector<2x4x32xf32> to vector<2x4x28xf32>
    %5 = tpu.iota {dimensions = array<i32: 0>} : vector<28x9xi32>
    %6 = tpu.iota {dimensions = array<i32: 1>} : vector<28x9xi32>
    %c3_i32 = arith.constant 3 : i32
    %7 = vector.broadcast %c3_i32 : i32 to vector<28x9xi32>
    %8 = arith.muli %7, %6 : vector<28x9xi32>
    %c0_i32 = arith.constant 0 : i32
    %9 = vector.broadcast %c0_i32 : i32 to vector<28x9xi32>
    %10 = arith.addi %8, %9 : vector<28x9xi32>
    %11 = arith.cmpi eq, %5, %10 : vector<28x9xi32>
    %12 = arith.extui %11 : vector<28x9xi1> to vector<28x9xi32>
    %13 = arith.sitofp %12 : vector<28x9xi32> to vector<28x9xf32>
    %c3_i32_4 = arith.constant 3 : i32
    %14 = vector.broadcast %c3_i32_4 : i32 to vector<28x9xi32>
    %15 = arith.muli %14, %6 : vector<28x9xi32>
    %c1_i32 = arith.constant 1 : i32
    %16 = vector.broadcast %c1_i32 : i32 to vector<28x9xi32>
    %17 = arith.addi %15, %16 : vector<28x9xi32>
    %18 = arith.cmpi eq, %5, %17 : vector<28x9xi32>
    %19 = arith.extui %18 : vector<28x9xi1> to vector<28x9xi32>
    %20 = arith.sitofp %19 : vector<28x9xi32> to vector<28x9xf32>
    %c3_i32_5 = arith.constant 3 : i32
    %21 = vector.broadcast %c3_i32_5 : i32 to vector<28x9xi32>
    %22 = arith.muli %21, %6 : vector<28x9xi32>
    %c2_i32 = arith.constant 2 : i32
    %23 = vector.broadcast %c2_i32 : i32 to vector<28x9xi32>
    %24 = arith.addi %22, %23 : vector<28x9xi32>
    %25 = arith.cmpi eq, %5, %24 : vector<28x9xi32>
    %26 = arith.extui %25 : vector<28x9xi1> to vector<28x9xi32>
    %27 = arith.sitofp %26 : vector<28x9xi32> to vector<28x9xf32>
    %28 = vector.extract_strided_slice %2 {offsets = [0, 0, 0], sizes = [1, 4, 28], strides = [1, 1, 1]} : vector<2x4x28xf32> to vector<1x4x28xf32>
    %29 = vector.shape_cast %28 : vector<1x4x28xf32> to vector<4x28xf32>
    %30 = vector.extract_strided_slice %3 {offsets = [0, 0, 0], sizes = [1, 4, 28], strides = [1, 1, 1]} : vector<2x4x28xf32> to vector<1x4x28xf32>
    %31 = vector.shape_cast %30 : vector<1x4x28xf32> to vector<4x28xf32>
    %32 = vector.extract_strided_slice %4 {offsets = [0, 0, 0], sizes = [1, 4, 28], strides = [1, 1, 1]} : vector<2x4x28xf32> to vector<1x4x28xf32>
    %33 = vector.shape_cast %32 : vector<1x4x28xf32> to vector<4x28xf32>
    %34 = tpu.concatenate %29, %31, %33 in 0 : vector<4x28xf32>, vector<4x28xf32>, vector<4x28xf32> -> vector<12x28xf32>
    %cst = arith.constant dense<0.000000e+00> : vector<8x28xf32>
    %35 = tpu.matmul %1, %34, %cst {dimension_numbers = #tpu.dot_dimension_numbers<[1], [0], [0], [1], [0, 0, 1, 1], [], []>} : vector<8x12xf32>, vector<12x28xf32>, vector<8x28xf32> -> vector<8x28xf32>
    %cst_6 = arith.constant dense<0.000000e+00> : vector<8x9xf32>
    %36 = tpu.matmul %35, %13, %cst_6 {dimension_numbers = #tpu.dot_dimension_numbers<[1], [0], [0], [1], [0, 0, 1, 1], [], []>} : vector<8x28xf32>, vector<28x9xf32>, vector<8x9xf32> -> vector<8x9xf32>
    %cst_7 = arith.constant dense<0.000000e+00> : vector<8x9xf32>
    %37 = tpu.matmul %35, %20, %cst_7 {dimension_numbers = #tpu.dot_dimension_numbers<[1], [0], [0], [1], [0, 0, 1, 1], [], []>} : vector<8x28xf32>, vector<28x9xf32>, vector<8x9xf32> -> vector<8x9xf32>
    %cst_8 = arith.constant dense<0.000000e+00> : vector<8x9xf32>
    %38 = tpu.matmul %35, %27, %cst_8 {dimension_numbers = #tpu.dot_dimension_numbers<[1], [0], [0], [1], [0, 0, 1, 1], [], []>} : vector<8x28xf32>, vector<28x9xf32>, vector<8x9xf32> -> vector<8x9xf32>
    %39 = arith.maximumf %36, %37 : vector<8x9xf32>
    %40 = arith.maximumf %39, %38 : vector<8x9xf32>
    %41 = vector.extract_strided_slice %2 {offsets = [1, 0, 0], sizes = [1, 4, 28], strides = [1, 1, 1]} : vector<2x4x28xf32> to vector<1x4x28xf32>
    %42 = vector.shape_cast %41 : vector<1x4x28xf32> to vector<4x28xf32>
    %43 = vector.extract_strided_slice %3 {offsets = [1, 0, 0], sizes = [1, 4, 28], strides = [1, 1, 1]} : vector<2x4x28xf32> to vector<1x4x28xf32>
    %44 = vector.shape_cast %43 : vector<1x4x28xf32> to vector<4x28xf32>
    %45 = vector.extract_strided_slice %4 {offsets = [1, 0, 0], sizes = [1, 4, 28], strides = [1, 1, 1]} : vector<2x4x28xf32> to vector<1x4x28xf32>
    %46 = vector.shape_cast %45 : vector<1x4x28xf32> to vector<4x28xf32>
    %47 = tpu.concatenate %42, %44, %46 in 0 : vector<4x28xf32>, vector<4x28xf32>, vector<4x28xf32> -> vector<12x28xf32>
    %cst_9 = arith.constant dense<0.000000e+00> : vector<8x28xf32>
    %48 = tpu.matmul %1, %47, %cst_9 {dimension_numbers = #tpu.dot_dimension_numbers<[1], [0], [0], [1], [0, 0, 1, 1], [], []>} : vector<8x12xf32>, vector<12x28xf32>, vector<8x28xf32> -> vector<8x28xf32>
    %cst_10 = arith.constant dense<0.000000e+00> : vector<8x9xf32>
    %49 = tpu.matmul %48, %13, %cst_10 {dimension_numbers = #tpu.dot_dimension_numbers<[1], [0], [0], [1], [0, 0, 1, 1], [], []>} : vector<8x28xf32>, vector<28x9xf32>, vector<8x9xf32> -> vector<8x9xf32>
    %cst_11 = arith.constant dense<0.000000e+00> : vector<8x9xf32>
    %50 = tpu.matmul %48, %20, %cst_11 {dimension_numbers = #tpu.dot_dimension_numbers<[1], [0], [0], [1], [0, 0, 1, 1], [], []>} : vector<8x28xf32>, vector<28x9xf32>, vector<8x9xf32> -> vector<8x9xf32>
    %cst_12 = arith.constant dense<0.000000e+00> : vector<8x9xf32>
    %51 = tpu.matmul %48, %27, %cst_12 {dimension_numbers = #tpu.dot_dimension_numbers<[1], [0], [0], [1], [0, 0, 1, 1], [], []>} : vector<8x28xf32>, vector<28x9xf32>, vector<8x9xf32> -> vector<8x9xf32>
    %52 = arith.maximumf %49, %50 : vector<8x9xf32>
    %53 = arith.maximumf %52, %51 : vector<8x9xf32>
    %54 = vector.shape_cast %40 : vector<8x9xf32> to vector<1x8x9xf32>
    %55 = vector.shape_cast %53 : vector<8x9xf32> to vector<1x8x9xf32>
    %56 = tpu.concatenate %54, %55 in 0 : vector<1x8x9xf32>, vector<1x8x9xf32> -> vector<2x8x9xf32>
    %c0_13 = arith.constant 0 : index
    %c0_14 = arith.constant 0 : index
    %c0_15 = arith.constant 0 : index
    %57 = vector.load %arg2[%c0_13, %c0_14, %c0_15] : memref<2x8x9xf32, #tpu.memory_space<vmem>>, vector<2x8x9xf32>
    tpu.vector_store %arg2[%c0_13, %c0_14, %c0_15], %56 {strides = array<i32>} : memref<2x8x9xf32, #tpu.memory_space<vmem>>, vector<2x8x9xf32>,
    return
  }
}

</mosaic_0001>

<llo_original>
// kernel: block_forward.1
$region0: #{block_forward.1}
  #allocation0 [shape = 'u32[]', space=smem, size = 0x4, offset = 0x4, fixed_abs, tag = 'smem constant byte address 0x4 - core index']
  #allocation1 [shape = 'u32[144,128]{1,0:T(1,128)}', space=vmem, size = 0x12000, scoped, tag = 'internal scratch']
  %s0 = inlined_call_operand.hbm [shape: f32[2,4,32], index: 0, kind: input, shape index: {}]
  %s1 = inlined_call_operand.hbm [shape: f32[8,12], index: 1, kind: input, shape index: {}]
  %s2 = inlined_call_operand.hbm [shape: f32[2,8,9], index: 2, kind: output, shape index: {}]
  %s3 = sld [smem:[#allocation0]]
  $region26: #{block_forward.1} parent=0
    _
  %s5 = ssub.s32 1, %s3
  %s6 = scalar_select 0, %s5, %s3
  $region1: #{block_forward.1} parent=0
    #allocation2 [shape = 'u8[4096]{0}', space=vmem, size = 0x1000, scoped, tag = 'input window, operand 0, single buffered']
    #allocation3 [shape = 's32[1]{0}', space=sflag, size = 0x4, scoped, tag = 'scoped memory for block_forward.1']
    #allocation4 [shape = 's32[1]{0}', space=sflag, size = 0x4, scoped, tag = 'scoped memory for block_forward.1']
    #allocation5 [shape = 'u8[4096]{0}', space=vmem, size = 0x1000, scoped, tag = 'input window, operand 1, single buffered']
    #allocation6 [shape = 's32[1]{0}', space=sflag, size = 0x4, scoped, tag = 'scoped memory for block_forward.1']
    #allocation7 [shape = 'u8[8192]{0}', space=vmem, size = 0x2000, scoped, tag = 'output window, operand 0, single buffered']
    %7 = vsyncpa [#allocation3], 0
    %8 = vsyncpa [#allocation6], 0
    %9 = vsyncpa [#allocation4], 0
    // Predicated region
    $region2: #{block_forward.1} parent=1 // pred_check
      _
    $region3: #{block_forward.1} parent=1 // pred_check_branch
      %11 = sbr.rel (0) target = $region5
    $region4: #{block_forward.1} parent=1 // pred_region
      %s13 = ssub.s32 128, 128
      %14 = vsyncadd [#allocation3], %s13
      %s15 = sshll.u32 [#allocation2], 4
      %s16 = int_to_ptr.vmem [resolvable:$true] %s15
      %21 = dma.hbm_to_vmem [thread:$0]  %s0, 128, %s16, [#allocation3], 64, 64, 4
    $region5: #{block_forward.1} parent=1 // pred_fallthru
      _
    // Predicated region
    $region6: #{block_forward.1} parent=1 // pred_check
      _
    $region7: #{block_forward.1} parent=1 // pred_check_branch
      %23 = sbr.rel (0) target = $region9
    $region8: #{block_forward.1} parent=1 // pred_region
      %s25 = ssub.s32 128, 128
      %26 = vsyncadd [#allocation6], %s25
      %s28 = sshll.u32 [#allocation5], 4
      %s29 = int_to_ptr.vmem [resolvable:$true] %s28
      %31 = dma.hbm_to_vmem [thread:$0]  %s1, 128, %s29, [#allocation6]
    $region9: #{block_forward.1} parent=1 // pred_fallthru
      _
    // Predicated region
    $region10: #{block_forward.1} parent=1 // pred_check
      _
    $region11: #{block_forward.1} parent=1 // pred_check_branch
      %33 = sbr.rel (0) target = $region13
    $region12: #{block_forward.1} parent=1 // pred_region
      %34 = dma.done [#allocation3], 128
    $region13: #{block_forward.1} parent=1 // pred_fallthru
      _
    // Predicated region
    $region14: #{block_forward.1} parent=1 // pred_check
      _
    $region15: #{block_forward.1} parent=1 // pred_check_branch
      %36 = sbr.rel (0) target = $region17
    $region16: #{block_forward.1} parent=1 // pred_region
      %37 = dma.done [#allocation6], 128
    $region17: #{block_forward.1} parent=1 // pred_fallthru
      _
    %v38 = vld [vmem:[#allocation2] sm:$0xf]
    %v39 = vld [vmem:[#allocation2 + $0x4] sm:$0xf]
    %v40 = vld [vmem:[#allocation5] sm:$0xff]
    %v41 = vlaneseq
    %v42 = vshrl.u32 %v41, 7
    %v43 = vadd.s32 %v42, 8
    %v44 = vadd.s32 %v42, 16
    %v45 = vadd.s32 %v42, 24
    %v46 = vlaneseq
    %v47 = vand.u32 %v46, 127
    %v48 = vmul.u32 %v47, 3
    %vm49 = vcmp.eq.s32.totalorder %v42, %v48
    %vm50 = vcmp.eq.s32.totalorder %v43, %v48
    %vm51 = vcmp.eq.s32.totalorder %v44, %v48
    %vm52 = vcmp.eq.s32.totalorder %v45, %v48
    %v53 = vsel %vm49, 1, 0
    %v54 = vsel %vm50, 1, 0
    %v55 = vsel %vm51, 1, 0
    %v56 = vsel %vm52, 1, 0
    %v57 = vcvt.s32.f32 %v53
    %v58 = vcvt.s32.f32 %v54
    %v59 = vcvt.s32.f32 %v55
    %v60 = vcvt.s32.f32 %v56
    %v61 = vadd.s32 %v48, 1
    %vm62 = vcmp.eq.s32.totalorder %v42, %v61
    %vm63 = vcmp.eq.s32.totalorder %v43, %v61
    %vm64 = vcmp.eq.s32.totalorder %v44, %v61
    %vm65 = vcmp.eq.s32.totalorder %v45, %v61
    %v66 = vsel %vm62, 1, 0
    %v67 = vsel %vm63, 1, 0
    %v68 = vsel %vm64, 1, 0
    %v69 = vsel %vm65, 1, 0
    %v70 = vcvt.s32.f32 %v66
    %v71 = vcvt.s32.f32 %v67
    %v72 = vcvt.s32.f32 %v68
    %v73 = vcvt.s32.f32 %v69
    %v74 = vadd.s32 %v48, 2
    %vm75 = vcmp.eq.s32.totalorder %v42, %v74
    %vm76 = vcmp.eq.s32.totalorder %v43, %v74
    %vm77 = vcmp.eq.s32.totalorder %v44, %v74
    %vm78 = vcmp.eq.s32.totalorder %v45, %v74
    %v79 = vsel %vm75, 1, 0
    %v80 = vsel %vm76, 1, 0
    %v81 = vsel %vm77, 1, 0
    %v82 = vsel %vm78, 1, 0
    %v83 = vcvt.s32.f32 %v79
    %v84 = vcvt.s32.f32 %v80
    %v85 = vcvt.s32.f32 %v81
    %v86 = vcvt.s32.f32 %v82
    %v88 = vrot.slane %v38, 4
    %89 = vrot.lane.b32.xlu0 %v88, 126
    %v90 = vpop.permute.xlu0 %89
    %92 = vrot.lane.b32.xlu0 %v38, 124
    %v93 = vpop.permute.xlu0 %92
    %vm94 = vcmask 1043456
    %v95 = vsel %vm94, %v38, %v90
    %vm96 = vcmask 97280
    %v98 = vsel %vm96, %v40, 0
    %v100 = vsel %vm94, %v93, 0
    %102 = vmatprep.subr.mxu0 0.0
    %103 = vmatpush1.msra.mxu0 %v95
    %104 = vmatprep.subr.mxu0 0.0
    %105 = vmatpush1.msra.mxu0 %v100
    %106 = vmatprep.subr.mxu0 0.0
    %107 = vmatpush1.msra.mxu0 0.0
    %108 = vmatprep.subr.mxu0 0.0
    %109 = vmatpush1.msra.mxu0 0.0
    %110 = vmatprep.subr.mxu0 0.0
    %111 = vmatpush1.msra.mxu0 0.0
    %112 = vmatprep.subr.mxu0 0.0
    %113 = vmatpush1.msra.mxu0 0.0
    %114 = vmatprep.subr.mxu0 0.0
    %115 = vmatpush1.msra.mxu0 0.0
    %116 = vmatprep.subr.mxu0 0.0
    %117 = vmatpush1.msra.mxu0 0.0
    %118 = vmatprep.subr.mxu0 0.0
    %119 = vmatpush1.msra.mxu0 0.0
    %120 = vmatprep.subr.mxu0 0.0
    %121 = vmatpush1.msra.mxu0 0.0
    %122 = vmatprep.subr.mxu0 0.0
    %123 = vmatpush1.msra.mxu0 0.0
    %124 = vmatprep.subr.mxu0 0.0
    %125 = vmatpush1.msra.mxu0 0.0
    %126 = vmatprep.subr.mxu0 0.0
    %127 = vmatpush1.msra.mxu0 0.0
    %128 = vmatprep.subr.mxu0 0.0
    %129 = vmatpush1.msra.mxu0 0.0
    %130 = vmatprep.subr.mxu0 0.0
    %131 = vmatpush1.msra.mxu0 0.0
    %132 = vmatprep.subr.mxu0 0.0
    %133 = vmatpush1.msra.mxu0 0.0
    %134 = vmatprep.subr.mxu0 0.0
    %135 = vmatpush1.msra.mxu0 0.0
    %136 = vmatprep.subr.mxu0 0.0
    %137 = vmatpush1.msra.mxu0 0.0
    %138 = vmatprep.subr.mxu0 0.0
    %139 = vmatpush1.msra.mxu0 0.0
    %140 = vmatprep.subr.mxu0 0.0
    %141 = vmatpush1.msra.mxu0 0.0
    %142 = vmatprep.subr.mxu0 0.0
    %143 = vmatpush1.msra.mxu0 0.0
    %144 = vmatprep.subr.mxu0 0.0
    %145 = vmatpush1.msra.mxu0 0.0
    %146 = vmatprep.subr.mxu0 0.0
    %147 = vmatpush1.msra.mxu0 0.0
    %148 = vmatprep.subr.mxu0 0.0
    %149 = vmatpush1.msra.mxu0 0.0
    %150 = vmatprep.subr.mxu0 0.0
    %151 = vmatpush1.msra.mxu0 0.0
    %152 = vmatprep.subr.mxu0 0.0
    %153 = vmatpush1.msra.mxu0 0.0
    %154 = vmatprep.subr.mxu0 0.0
    %155 = vmatpush1.msra.mxu0 0.0
    %156 = vmatprep.subr.mxu0 0.0
    %157 = vmatpush1.msra.mxu0 0.0
    %158 = vmatprep.subr.mxu0 0.0
    %159 = vmatpush1.msra.mxu0 0.0
    %160 = vmatprep.subr.mxu0 0.0
    %161 = vmatpush1.msra.mxu0 0.0
    %162 = vmatprep.subr.mxu0 0.0
    %163 = vmatpush1.msra.mxu0 0.0
    %164 = vmatprep.subr.mxu0 0.0
    %165 = vmatpush1.msra.mxu0 0.0
    %166 = vmatprep.mubr.f32.mxu0 0.0
    %167 = vmatmul.mubr.f32.gmra.mrb[0].mxu0 %v98
    %v168 = vpop.f32.mrb[0].mxu0
    %v169 = vadd.f32 0.0, %v168
    %v170 = vpop.f32.mrb[0].mxu0
    %171 = vdwg.mxu0
    %vm172 = vcmask 228352
    %v174 = vsel %vm172, %v169, 0
    %v177 = vsel %vm94, %v60, 0
    %179 = vmatprep.subr.mxu0 0.0
    %180 = vmatpush1.msra.mxu0 %v57
    %181 = vmatprep.subr.mxu0 0.0
    %182 = vmatpush1.msra.mxu0 %v58
    %183 = vmatprep.subr.mxu0 0.0
    %184 = vmatpush1.msra.mxu0 %v59
    %185 = vmatprep.subr.mxu0 0.0
    %186 = vmatpush1.msra.mxu0 %v177
    %187 = vmatprep.subr.mxu0 0.0
    %188 = vmatpush1.msra.mxu0 0.0
    %189 = vmatprep.subr.mxu0 0.0
    %190 = vmatpush1.msra.mxu0 0.0
    %191 = vmatprep.subr.mxu0 0.0
    %192 = vmatpush1.msra.mxu0 0.0
    %193 = vmatprep.subr.mxu0 0.0
    %194 = vmatpush1.msra.mxu0 0.0
    %195 = vmatprep.subr.mxu0 0.0
    %196 = vmatpush1.msra.mxu0 0.0
    %197 = vmatprep.subr.mxu0 0.0
    %198 = vmatpush1.msra.mxu0 0.0
    %199 = vmatprep.subr.mxu0 0.0
    %200 = vmatpush1.msra.mxu0 0.0
    %201 = vmatprep.subr.mxu0 0.0
    %202 = vmatpush1.msra.mxu0 0.0
    %203 = vmatprep.subr.mxu0 0.0
    %204 = vmatpush1.msra.mxu0 0.0
    %205 = vmatprep.subr.mxu0 0.0
    %206 = vmatpush1.msra.mxu0 0.0
    %207 = vmatprep.subr.mxu0 0.0
    %208 = vmatpush1.msra.mxu0 0.0
    %209 = vmatprep.subr.mxu0 0.0
    %210 = vmatpush1.msra.mxu0 0.0
    %211 = vmatprep.subr.mxu0 0.0
    %212 = vmatpush1.msra.mxu0 0.0
    %213 = vmatprep.subr.mxu0 0.0
    %214 = vmatpush1.msra.mxu0 0.0
    %215 = vmatprep.subr.mxu0 0.0
    %216 = vmatpush1.msra.mxu0 0.0
    %217 = vmatprep.subr.mxu0 0.0
    %218 = vmatpush1.msra.mxu0 0.0
    %219 = vmatprep.subr.mxu0 0.0
    %220 = vmatpush1.msra.mxu0 0.0
    %221 = vmatprep.subr.mxu0 0.0
    %222 = vmatpush1.msra.mxu0 0.0
    %223 = vmatprep.subr.mxu0 0.0
    %224 = vmatpush1.msra.mxu0 0.0
    %225 = vmatprep.subr.mxu0 0.0
    %226 = vmatpush1.msra.mxu0 0.0
    %227 = vmatprep.subr.mxu0 0.0
    %228 = vmatpush1.msra.mxu0 0.0
    %229 = vmatprep.subr.mxu0 0.0
    %230 = vmatpush1.msra.mxu0 0.0
    %231 = vmatprep.subr.mxu0 0.0
    %232 = vmatpush1.msra.mxu0 0.0
    %233 = vmatprep.subr.mxu0 0.0
    %234 = vmatpush1.msra.mxu0 0.0
    %235 = vmatprep.subr.mxu0 0.0
    %236 = vmatpush1.msra.mxu0 0.0
    %237 = vmatprep.subr.mxu0 0.0
    %238 = vmatpush1.msra.mxu0 0.0
    %239 = vmatprep.subr.mxu0 0.0
    %240 = vmatpush1.msra.mxu0 0.0
    %241 = vmatprep.subr.mxu0 0.0
    %242 = vmatpush1.msra.mxu0 0.0
    %243 = vmatprep.mubr.f32.mxu0 0.0
    %244 = vmatmul.mubr.f32.gmra.mrb[0].mxu0 %v174
    %v245 = vpop.f32.mrb[0].mxu0
    %v246 = vadd.f32 0.0, %v245
    %v247 = vpop.f32.mrb[0].mxu0
    %248 = vdwg.mxu0
    %v250 = vsel %vm94, %v73, 0
    %252 = vmatprep.subr.mxu0 0.0
    %253 = vmatpush1.msra.mxu0 %v70
    %254 = vmatprep.subr.mxu0 0.0
    %255 = vmatpush1.msra.mxu0 %v71
    %256 = vmatprep.subr.mxu0 0.0
    %257 = vmatpush1.msra.mxu0 %v72
    %258 = vmatprep.subr.mxu0 0.0
    %259 = vmatpush1.msra.mxu0 %v250
    %260 = vmatprep.subr.mxu0 0.0
    %261 = vmatpush1.msra.mxu0 0.0
    %262 = vmatprep.subr.mxu0 0.0
    %263 = vmatpush1.msra.mxu0 0.0
    %264 = vmatprep.subr.mxu0 0.0
    %265 = vmatpush1.msra.mxu0 0.0
    %266 = vmatprep.subr.mxu0 0.0
    %267 = vmatpush1.msra.mxu0 0.0
    %268 = vmatprep.subr.mxu0 0.0
    %269 = vmatpush1.msra.mxu0 0.0
    %270 = vmatprep.subr.mxu0 0.0
    %271 = vmatpush1.msra.mxu0 0.0
    %272 = vmatprep.subr.mxu0 0.0
    %273 = vmatpush1.msra.mxu0 0.0
    %274 = vmatprep.subr.mxu0 0.0
    %275 = vmatpush1.msra.mxu0 0.0
    %276 = vmatprep.subr.mxu0 0.0
    %277 = vmatpush1.msra.mxu0 0.0
    %278 = vmatprep.subr.mxu0 0.0
    %279 = vmatpush1.msra.mxu0 0.0
    %280 = vmatprep.subr.mxu0 0.0
    %281 = vmatpush1.msra.mxu0 0.0
    %282 = vmatprep.subr.mxu0 0.0
    %283 = vmatpush1.msra.mxu0 0.0
    %284 = vmatprep.subr.mxu0 0.0
    %285 = vmatpush1.msra.mxu0 0.0
    %286 = vmatprep.subr.mxu0 0.0
    %287 = vmatpush1.msra.mxu0 0.0
    %288 = vmatprep.subr.mxu0 0.0
    %289 = vmatpush1.msra.mxu0 0.0
    %290 = vmatprep.subr.mxu0 0.0
    %291 = vmatpush1.msra.mxu0 0.0
    %292 = vmatprep.subr.mxu0 0.0
    %293 = vmatpush1.msra.mxu0 0.0
    %294 = vmatprep.subr.mxu0 0.0
    %295 = vmatpush1.msra.mxu0 0.0
    %296 = vmatprep.subr.mxu0 0.0
    %297 = vmatpush1.msra.mxu0 0.0
    %298 = vmatprep.subr.mxu0 0.0
    %299 = vmatpush1.msra.mxu0 0.0
    %300 = vmatprep.subr.mxu0 0.0
    %301 = vmatpush1.msra.mxu0 0.0
    %302 = vmatprep.subr.mxu0 0.0
    %303 = vmatpush1.msra.mxu0 0.0
    %304 = vmatprep.subr.mxu0 0.0
    %305 = vmatpush1.msra.mxu0 0.0
    %306 = vmatprep.subr.mxu0 0.0
    %307 = vmatpush1.msra.mxu0 0.0
    %308 = vmatprep.subr.mxu0 0.0
    %309 = vmatpush1.msra.mxu0 0.0
    %310 = vmatprep.subr.mxu0 0.0
    %311 = vmatpush1.msra.mxu0 0.0
    %312 = vmatprep.subr.mxu0 0.0
    %313 = vmatpush1.msra.mxu0 0.0
    %314 = vmatprep.subr.mxu0 0.0
    %315 = vmatpush1.msra.mxu0 0.0
    %316 = vmatprep.mubr.f32.mxu0 0.0
    %317 = vmatmul.mubr.f32.gmra.mrb[0].mxu0 %v174
    %v318 = vpop.f32.mrb[0].mxu0
    %v319 = vadd.f32 0.0, %v318
    %v320 = vpop.f32.mrb[0].mxu0
    %321 = vdwg.mxu0
    %v323 = vsel %vm94, %v86, 0
    %325 = vmatprep.subr.mxu0 0.0
    %326 = vmatpush1.msra.mxu0 %v83
    %327 = vmatprep.subr.mxu0 0.0
    %328 = vmatpush1.msra.mxu0 %v84
    %329 = vmatprep.subr.mxu0 0.0
    %330 = vmatpush1.msra.mxu0 %v85
    %331 = vmatprep.subr.mxu0 0.0
    %332 = vmatpush1.msra.mxu0 %v323
    %333 = vmatprep.subr.mxu0 0.0
    %334 = vmatpush1.msra.mxu0 0.0
    %335 = vmatprep.subr.mxu0 0.0
    %336 = vmatpush1.msra.mxu0 0.0
    %337 = vmatprep.subr.mxu0 0.0
    %338 = vmatpush1.msra.mxu0 0.0
    %339 = vmatprep.subr.mxu0 0.0
    %340 = vmatpush1.msra.mxu0 0.0
    %341 = vmatprep.subr.mxu0 0.0
    %342 = vmatpush1.msra.mxu0 0.0
    %343 = vmatprep.subr.mxu0 0.0
    %344 = vmatpush1.msra.mxu0 0.0
    %345 = vmatprep.subr.mxu0 0.0
    %346 = vmatpush1.msra.mxu0 0.0
    %347 = vmatprep.subr.mxu0 0.0
    %348 = vmatpush1.msra.mxu0 0.0
    %349 = vmatprep.subr.mxu0 0.0
    %350 = vmatpush1.msra.mxu0 0.0
    %351 = vmatprep.subr.mxu0 0.0
    %352 = vmatpush1.msra.mxu0 0.0
    %353 = vmatprep.subr.mxu0 0.0
    %354 = vmatpush1.msra.mxu0 0.0
    %355 = vmatprep.subr.mxu0 0.0
    %356 = vmatpush1.msra.mxu0 0.0
    %357 = vmatprep.subr.mxu0 0.0
    %358 = vmatpush1.msra.mxu0 0.0
    %359 = vmatprep.subr.mxu0 0.0
    %360 = vmatpush1.msra.mxu0 0.0
    %361 = vmatprep.subr.mxu0 0.0
    %362 = vmatpush1.msra.mxu0 0.0
    %363 = vmatprep.subr.mxu0 0.0
    %364 = vmatpush1.msra.mxu0 0.0
    %365 = vmatprep.subr.mxu0 0.0
    %366 = vmatpush1.msra.mxu0 0.0
    %367 = vmatprep.subr.mxu0 0.0
    %368 = vmatpush1.msra.mxu0 0.0
    %369 = vmatprep.subr.mxu0 0.0
    %370 = vmatpush1.msra.mxu0 0.0
    %371 = vmatprep.subr.mxu0 0.0
    %372 = vmatpush1.msra.mxu0 0.0
    %373 = vmatprep.subr.mxu0 0.0
    %374 = vmatpush1.msra.mxu0 0.0
    %375 = vmatprep.subr.mxu0 0.0
    %376 = vmatpush1.msra.mxu0 0.0
    %377 = vmatprep.subr.mxu0 0.0
    %378 = vmatpush1.msra.mxu0 0.0
    %379 = vmatprep.subr.mxu0 0.0
    %380 = vmatpush1.msra.mxu0 0.0
    %381 = vmatprep.subr.mxu0 0.0
    %382 = vmatpush1.msra.mxu0 0.0
    %383 = vmatprep.subr.mxu0 0.0
    %384 = vmatpush1.msra.mxu0 0.0
    %385 = vmatprep.subr.mxu0 0.0
    %386 = vmatpush1.msra.mxu0 0.0
    %387 = vmatprep.subr.mxu0 0.0
    %388 = vmatpush1.msra.mxu0 0.0
    %389 = vmatprep.mubr.f32.mxu0 0.0
    %390 = vmatmul.mubr.f32.gmra.mrb[0].mxu0 %v174
    %v391 = vpop.f32.mrb[0].mxu0
    %v392 = vadd.f32 0.0, %v391
    %v393 = vpop.f32.mrb[0].mxu0
    %394 = vdwg.mxu0
    %v395 = vmax.f32 %v246, %v319
    %v396 = vmax.f32 %v395, %v392
    %v398 = vrot.slane %v39, 4
    %399 = vrot.lane.b32.xlu0 %v398, 126
    %v400 = vpop.permute.xlu0 %399
    %402 = vrot.lane.b32.xlu0 %v39, 124
    %v403 = vpop.permute.xlu0 %402
    %v404 = vsel %vm94, %v39, %v400
    %v405 = vsel %vm94, %v403, 0
    %407 = vmatprep.subr.mxu0 0.0
    %408 = vmatpush1.msra.mxu0 %v404
    %409 = vmatprep.subr.mxu0 0.0
    %410 = vmatpush1.msra.mxu0 %v405
    %411 = vmatprep.subr.mxu0 0.0
    %412 = vmatpush1.msra.mxu0 0.0
    %413 = vmatprep.subr.mxu0 0.0
    %414 = vmatpush1.msra.mxu0 0.0
    %415 = vmatprep.subr.mxu0 0.0
    %416 = vmatpush1.msra.mxu0 0.0
    %417 = vmatprep.subr.mxu0 0.0
    %418 = vmatpush1.msra.mxu0 0.0
    %419 = vmatprep.subr.mxu0 0.0
    %420 = vmatpush1.msra.mxu0 0.0
    %421 = vmatprep.subr.mxu0 0.0
    %422 = vmatpush1.msra.mxu0 0.0
    %423 = vmatprep.subr.mxu0 0.0
    %424 = vmatpush1.msra.mxu0 0.0
    %425 = vmatprep.subr.mxu0 0.0
    %426 = vmatpush1.msra.mxu0 0.0
    %427 = vmatprep.subr.mxu0 0.0
    %428 = vmatpush1.msra.mxu0 0.0
    %429 = vmatprep.subr.mxu0 0.0
    %430 = vmatpush1.msra.mxu0 0.0
    %431 = vmatprep.subr.mxu0 0.0
    %432 = vmatpush1.msra.mxu0 0.0
    %433 = vmatprep.subr.mxu0 0.0
    %434 = vmatpush1.msra.mxu0 0.0
    %435 = vmatprep.subr.mxu0 0.0
    %436 = vmatpush1.msra.mxu0 0.0
    %437 = vmatprep.subr.mxu0 0.0
    %438 = vmatpush1.msra.mxu0 0.0
    %439 = vmatprep.subr.mxu0 0.0
    %440 = vmatpush1.msra.mxu0 0.0
    %441 = vmatprep.subr.mxu0 0.0
    %442 = vmatpush1.msra.mxu0 0.0
    %443 = vmatprep.subr.mxu0 0.0
    %444 = vmatpush1.msra.mxu0 0.0
    %445 = vmatprep.subr.mxu0 0.0
    %446 = vmatpush1.msra.mxu0 0.0
    %447 = vmatprep.subr.mxu0 0.0
    %448 = vmatpush1.msra.mxu0 0.0
    %449 = vmatprep.subr.mxu0 0.0
    %450 = vmatpush1.msra.mxu0 0.0
    %451 = vmatprep.subr.mxu0 0.0
    %452 = vmatpush1.msra.mxu0 0.0
    %453 = vmatprep.subr.mxu0 0.0
    %454 = vmatpush1.msra.mxu0 0.0
    %455 = vmatprep.subr.mxu0 0.0
    %456 = vmatpush1.msra.mxu0 0.0
    %457 = vmatprep.subr.mxu0 0.0
    %458 = vmatpush1.msra.mxu0 0.0
    %459 = vmatprep.subr.mxu0 0.0
    %460 = vmatpush1.msra.mxu0 0.0
    %461 = vmatprep.subr.mxu0 0.0
    %462 = vmatpush1.msra.mxu0 0.0
    %463 = vmatprep.subr.mxu0 0.0
    %464 = vmatpush1.msra.mxu0 0.0
    %465 = vmatprep.subr.mxu0 0.0
    %466 = vmatpush1.msra.mxu0 0.0
    %467 = vmatprep.subr.mxu0 0.0
    %468 = vmatpush1.msra.mxu0 0.0
    %469 = vmatprep.subr.mxu0 0.0
    %470 = vmatpush1.msra.mxu0 0.0
    %471 = vmatprep.mubr.f32.mxu0 0.0
    %472 = vmatmul.mubr.f32.gmra.mrb[0].mxu0 %v98
    %v473 = vpop.f32.mrb[0].mxu0
    %v474 = vadd.f32 0.0, %v473
    %v475 = vpop.f32.mrb[0].mxu0
    %476 = vdwg.mxu0
    %v478 = vsel %vm172, %v474, 0
    %480 = vmatprep.subr.mxu0 0.0
    %481 = vmatpush1.msra.mxu0 %v57
    %482 = vmatprep.subr.mxu0 0.0
    %483 = vmatpush1.msra.mxu0 %v58
    %484 = vmatprep.subr.mxu0 0.0
    %485 = vmatpush1.msra.mxu0 %v59
    %486 = vmatprep.subr.mxu0 0.0
    %487 = vmatpush1.msra.mxu0 %v177
    %488 = vmatprep.subr.mxu0 0.0
    %489 = vmatpush1.msra.mxu0 0.0
    %490 = vmatprep.subr.mxu0 0.0
    %491 = vmatpush1.msra.mxu0 0.0
    %492 = vmatprep.subr.mxu0 0.0
    %493 = vmatpush1.msra.mxu0 0.0
    %494 = vmatprep.subr.mxu0 0.0
    %495 = vmatpush1.msra.mxu0 0.0
    %496 = vmatprep.subr.mxu0 0.0
    %497 = vmatpush1.msra.mxu0 0.0
    %498 = vmatprep.subr.mxu0 0.0
    %499 = vmatpush1.msra.mxu0 0.0
    %500 = vmatprep.subr.mxu0 0.0
    %501 = vmatpush1.msra.mxu0 0.0
    %502 = vmatprep.subr.mxu0 0.0
    %503 = vmatpush1.msra.mxu0 0.0
    %504 = vmatprep.subr.mxu0 0.0
    %505 = vmatpush1.msra.mxu0 0.0
    %506 = vmatprep.subr.mxu0 0.0
    %507 = vmatpush1.msra.mxu0 0.0
    %508 = vmatprep.subr.mxu0 0.0
    %509 = vmatpush1.msra.mxu0 0.0
    %510 = vmatprep.subr.mxu0 0.0
    %511 = vmatpush1.msra.mxu0 0.0
    %512 = vmatprep.subr.mxu0 0.0
    %513 = vmatpush1.msra.mxu0 0.0
    %514 = vmatprep.subr.mxu0 0.0
    %515 = vmatpush1.msra.mxu0 0.0
    %516 = vmatprep.subr.mxu0 0.0
    %517 = vmatpush1.msra.mxu0 0.0
    %518 = vmatprep.subr.mxu0 0.0
    %519 = vmatpush1.msra.mxu0 0.0
    %520 = vmatprep.subr.mxu0 0.0
    %521 = vmatpush1.msra.mxu0 0.0
    %522 = vmatprep.subr.mxu0 0.0
    %523 = vmatpush1.msra.mxu0 0.0
    %524 = vmatprep.subr.mxu0 0.0
    %525 = vmatpush1.msra.mxu0 0.0
    %526 = vmatprep.subr.mxu0 0.0
    %527 = vmatpush1.msra.mxu0 0.0
    %528 = vmatprep.subr.mxu0 0.0
    %529 = vmatpush1.msra.mxu0 0.0
    %530 = vmatprep.subr.mxu0 0.0
    %531 = vmatpush1.msra.mxu0 0.0
    %532 = vmatprep.subr.mxu0 0.0
    %533 = vmatpush1.msra.mxu0 0.0
    %534 = vmatprep.subr.mxu0 0.0
    %535 = vmatpush1.msra.mxu0 0.0
    %536 = vmatprep.subr.mxu0 0.0
    %537 = vmatpush1.msra.mxu0 0.0
    %538 = vmatprep.subr.mxu0 0.0
    %539 = vmatpush1.msra.mxu0 0.0
    %540 = vmatprep.subr.mxu0 0.0
    %541 = vmatpush1.msra.mxu0 0.0
    %542 = vmatprep.subr.mxu0 0.0
    %543 = vmatpush1.msra.mxu0 0.0
    %544 = vmatprep.mubr.f32.mxu0 0.0
    %545 = vmatmul.mubr.f32.gmra.mrb[0].mxu0 %v478
    %v546 = vpop.f32.mrb[0].mxu0
    %v547 = vadd.f32 0.0, %v546
    %v548 = vpop.f32.mrb[0].mxu0
    %549 = vdwg.mxu0
    %550 = vmatprep.subr.mxu0 0.0
    %551 = vmatpush1.msra.mxu0 %v70
    %552 = vmatprep.subr.mxu0 0.0
    %553 = vmatpush1.msra.mxu0 %v71
    %554 = vmatprep.subr.mxu0 0.0
    %555 = vmatpush1.msra.mxu0 %v72
    %556 = vmatprep.subr.mxu0 0.0
    %557 = vmatpush1.msra.mxu0 %v250
    %558 = vmatprep.subr.mxu0 0.0
    %559 = vmatpush1.msra.mxu0 0.0
    %560 = vmatprep.subr.mxu0 0.0
    %561 = vmatpush1.msra.mxu0 0.0
    %562 = vmatprep.subr.mxu0 0.0
    %563 = vmatpush1.msra.mxu0 0.0
    %564 = vmatprep.subr.mxu0 0.0
    %565 = vmatpush1.msra.mxu0 0.0
    %566 = vmatprep.subr.mxu0 0.0
    %567 = vmatpush1.msra.mxu0 0.0
    %568 = vmatprep.subr.mxu0 0.0
    %569 = vmatpush1.msra.mxu0 0.0
    %570 = vmatprep.subr.mxu0 0.0
    %571 = vmatpush1.msra.mxu0 0.0
    %572 = vmatprep.subr.mxu0 0.0
    %573 = vmatpush1.msra.mxu0 0.0
    %574 = vmatprep.subr.mxu0 0.0
    %575 = vmatpush1.msra.mxu0 0.0
    %576 = vmatprep.subr.mxu0 0.0
    %577 = vmatpush1.msra.mxu0 0.0
    %578 = vmatprep.subr.mxu0 0.0
    %579 = vmatpush1.msra.mxu0 0.0
    %580 = vmatprep.subr.mxu0 0.0
    %581 = vmatpush1.msra.mxu0 0.0
    %582 = vmatprep.subr.mxu0 0.0
    %583 = vmatpush1.msra.mxu0 0.0
    %584 = vmatprep.subr.mxu0 0.0
    %585 = vmatpush1.msra.mxu0 0.0
    %586 = vmatprep.subr.mxu0 0.0
    %587 = vmatpush1.msra.mxu0 0.0
    %588 = vmatprep.subr.mxu0 0.0
    %589 = vmatpush1.msra.mxu0 0.0
    %590 = vmatprep.subr.mxu0 0.0
    %591 = vmatpush1.msra.mxu0 0.0
    %592 = vmatprep.subr.mxu0 0.0
    %593 = vmatpush1.msra.mxu0 0.0
    %594 = vmatprep.subr.mxu0 0.0
    %595 = vmatpush1.msra.mxu0 0.0
    %596 = vmatprep.subr.mxu0 0.0
    %597 = vmatpush1.msra.mxu0 0.0
    %598 = vmatprep.subr.mxu0 0.0
    %599 = vmatpush1.msra.mxu0 0.0
    %600 = vmatprep.subr.mxu0 0.0
    %601 = vmatpush1.msra.mxu0 0.0
    %602 = vmatprep.subr.mxu0 0.0
    %603 = vmatpush1.msra.mxu0 0.0
    %604 = vmatprep.subr.mxu0 0.0
    %605 = vmatpush1.msra.mxu0 0.0
    %606 = vmatprep.subr.mxu0 0.0
    %607 = vmatpush1.msra.mxu0 0.0
    %608 = vmatprep.subr.mxu0 0.0
    %609 = vmatpush1.msra.mxu0 0.0
    %610 = vmatprep.subr.mxu0 0.0
    %611 = vmatpush1.msra.mxu0 0.0
    %612 = vmatprep.subr.mxu0 0.0
    %613 = vmatpush1.msra.mxu0 0.0
    %614 = vmatprep.mubr.f32.mxu0 0.0
    %615 = vmatmul.mubr.f32.gmra.mrb[0].mxu0 %v478
    %v616 = vpop.f32.mrb[0].mxu0
    %v617 = vadd.f32 0.0, %v616
    %v618 = vpop.f32.mrb[0].mxu0
    %619 = vdwg.mxu0
    %620 = vmatprep.subr.mxu0 0.0
    %621 = vmatpush1.msra.mxu0 %v83
    %622 = vmatprep.subr.mxu0 0.0
    %623 = vmatpush1.msra.mxu0 %v84
    %624 = vmatprep.subr.mxu0 0.0
    %625 = vmatpush1.msra.mxu0 %v85
    %626 = vmatprep.subr.mxu0 0.0
    %627 = vmatpush1.msra.mxu0 %v323
    %628 = vmatprep.subr.mxu0 0.0
    %629 = vmatpush1.msra.mxu0 0.0
    %630 = vmatprep.subr.mxu0 0.0
    %631 = vmatpush1.msra.mxu0 0.0
    %632 = vmatprep.subr.mxu0 0.0
    %633 = vmatpush1.msra.mxu0 0.0
    %634 = vmatprep.subr.mxu0 0.0
    %635 = vmatpush1.msra.mxu0 0.0
    %636 = vmatprep.subr.mxu0 0.0
    %637 = vmatpush1.msra.mxu0 0.0
    %638 = vmatprep.subr.mxu0 0.0
    %639 = vmatpush1.msra.mxu0 0.0
    %640 = vmatprep.subr.mxu0 0.0
    %641 = vmatpush1.msra.mxu0 0.0
    %642 = vmatprep.subr.mxu0 0.0
    %643 = vmatpush1.msra.mxu0 0.0
    %644 = vmatprep.subr.mxu0 0.0
    %645 = vmatpush1.msra.mxu0 0.0
    %646 = vmatprep.subr.mxu0 0.0
    %647 = vmatpush1.msra.mxu0 0.0
    %648 = vmatprep.subr.mxu0 0.0
    %649 = vmatpush1.msra.mxu0 0.0
    %650 = vmatprep.subr.mxu0 0.0
    %651 = vmatpush1.msra.mxu0 0.0
    %652 = vmatprep.subr.mxu0 0.0
    %653 = vmatpush1.msra.mxu0 0.0
    %654 = vmatprep.subr.mxu0 0.0
    %655 = vmatpush1.msra.mxu0 0.0
    %656 = vmatprep.subr.mxu0 0.0
    %657 = vmatpush1.msra.mxu0 0.0
    %658 = vmatprep.subr.mxu0 0.0
    %659 = vmatpush1.msra.mxu0 0.0
    %660 = vmatprep.subr.mxu0 0.0
    %661 = vmatpush1.msra.mxu0 0.0
    %662 = vmatprep.subr.mxu0 0.0
    %663 = vmatpush1.msra.mxu0 0.0
    %664 = vmatprep.subr.mxu0 0.0
    %665 = vmatpush1.msra.mxu0 0.0
    %666 = vmatprep.subr.mxu0 0.0
    %667 = vmatpush1.msra.mxu0 0.0
    %668 = vmatprep.subr.mxu0 0.0
    %669 = vmatpush1.msra.mxu0 0.0
    %670 = vmatprep.subr.mxu0 0.0
    %671 = vmatpush1.msra.mxu0 0.0
    %672 = vmatprep.subr.mxu0 0.0
    %673 = vmatpush1.msra.mxu0 0.0
    %674 = vmatprep.subr.mxu0 0.0
    %675 = vmatpush1.msra.mxu0 0.0
    %676 = vmatprep.subr.mxu0 0.0
    %677 = vmatpush1.msra.mxu0 0.0
    %678 = vmatprep.subr.mxu0 0.0
    %679 = vmatpush1.msra.mxu0 0.0
    %680 = vmatprep.subr.mxu0 0.0
    %681 = vmatpush1.msra.mxu0 0.0
    %682 = vmatprep.subr.mxu0 0.0
    %683 = vmatpush1.msra.mxu0 0.0
    %684 = vmatprep.mubr.f32.mxu0 0.0
    %685 = vmatmul.mubr.f32.gmra.mrb[0].mxu0 %v478
    %v686 = vpop.f32.mrb[0].mxu0
    %v687 = vadd.f32 0.0, %v686
    %v688 = vpop.f32.mrb[0].mxu0
    %689 = vdwg.mxu0
    %v690 = vmax.f32 %v547, %v617
    %v691 = vmax.f32 %v690, %v687
    %vm692 = vcmask 72704
    %693 = vst.msk [vmem:[#allocation7] sm:$0xff] %vm692, %v396
    %694 = vst.msk [vmem:[#allocation7 + $0x8] sm:$0xff] %vm692, %v691
    // Predicated region
    $region18: #{block_forward.1} parent=1 // pred_check
      _
    $region19: #{block_forward.1} parent=1 // pred_check_branch
      %696 = sbr.rel (0) target = $region21
    $region20: #{block_forward.1} parent=1 // pred_region
      %s698 = ssub.s32 256, 256
      %699 = vsyncadd [#allocation4], %s698
      %s700 = sshll.u32 [#allocation7], 4
      %s701 = int_to_ptr.vmem [resolvable:$true] %s700
      %706 = dma.vmem_to_hbm [thread:$0]  %s701, 256, %s2, [#allocation4], 128, 128, 8
    $region21: #{block_forward.1} parent=1 // pred_fallthru
      _
    // Predicated region
    $region22: #{block_forward.1} parent=1 // pred_check
      _
    $region23: #{block_forward.1} parent=1 // pred_check_branch
      %708 = sbr.rel (0) target = $region25
    $region24: #{block_forward.1} parent=1 // pred_region
      %709 = dma.done [#allocation4], 256
    $region25: #{block_forward.1} parent=1 // pred_fallthru
      _
    %710 = vsyncpa [#allocation3], 1
    %711 = vsyncpa [#allocation6], 1
    %712 = vsyncpa [#allocation4], 1

</llo_original>
